<compile_context>
chip_gen: v7x
topology: tpu7x:2x2x1
jax: 0.10.0
libtpu: 0.0.40
codegen_flags: <defaults>
</compile_context>

<pallas_src>
import math

import jax
import jax.numpy as jnp
from jax.experimental import pallas as pl
from jax.experimental.pallas import tpu as pltpu


def _nonspiking_kernel(x_ref, state_ref, a_ref, t_ref, b_ref, out_ref):
    """out = A * state + T * x + B (elementwise; params broadcast over batch)."""
    cdt = a_ref.dtype  # compute dtype
    x = x_ref[...].astype(cdt)
    s = state_ref[...].astype(cdt)
    out = s * a_ref[...] + t_ref[...] * x + b_ref[...]
    out_ref[...] = out.astype(out_ref.dtype)


def _choose_block_batch(batch, row_bytes, sublane, target_bytes=4 << 20):
    """Pick a sublane-aligned batch-tile height.

    Targets ~target_bytes per input stream, but caps the tile so the grid has
    >= ~4 steps (pipeline overlap + v7x megacore sharding), and never exceeds
    the array.
    """
    if batch <= sublane:
        return batch  # full-batch block (== array dim, always a legal block shape)
    rows = max(sublane, target_bytes // max(1, row_bytes))
    rows = (rows // sublane) * sublane
    # Guarantee >= ~4 grid steps so DMA/compute overlap and (on v7x) the two
    # TensorCores actually engage.
    quarter = max(sublane, (batch // 4 // sublane) * sublane)
    rows = min(rows, quarter)
    rows = min(rows, (batch // sublane) * sublane)
    return max(sublane, rows)


def nonspiking_forward(x, state, tau, leak, rest, bias, *, block_batch=None,
                       compute_dtype=jnp.float32):
    """Single NonSpikingLayer update.  x, state: (batch, size); params: (size,)."""
    batch, size = x.shape
    out_dtype = state.dtype
    cdt = jnp.dtype(compute_dtype)

    # Pre-fuse the per-neuron parameters (host side, negligible cost):
    #   state + tau*(-leak*(state - rest) + bias + x)
    #     = (1 - tau*leak)*state + tau*x + tau*(leak*rest + bias)
    tau_c = tau.astype(cdt)
    leak_c = leak.astype(cdt)
    a = (1.0 - tau_c * leak_c).astype(cdt)
    b = (tau_c * (leak_c * rest.astype(cdt) + bias.astype(cdt))).astype(cdt)
    t = tau_c

    # Lane-density fold: (batch, size) -> (batch//k, k*size) so the output last
    # dim is a multiple of 128 (full-lane stores instead of masked vst.msk).
    k = 1
    if size % 128 != 0:
        kk = 128 // math.gcd(size, 128)
        if kk > 1 and batch % kk == 0:
            k = kk
    batch_f, size_f = batch // k, size * k
    if k > 1:
        x_f = x.reshape(batch_f, size_f)
        s_f = state.reshape(batch_f, size_f)
        a_f = jnp.tile(a, k).reshape(1, size_f)
        t_f = jnp.tile(t, k).reshape(1, size_f)
        b_f = jnp.tile(b, k).reshape(1, size_f)
    else:
        x_f, s_f = x, state
        a_f = a.reshape(1, size_f)
        t_f = t.reshape(1, size_f)
        b_f = b.reshape(1, size_f)

    itemsize = jnp.dtype(x.dtype).itemsize
    # Sublane packing: 8 rows for 32-bit, 16 for 16-bit, 32 for 8-bit dtypes.
    sublane = 8 * max(1, 4 // itemsize)

    if block_batch is None:
        block_batch = _choose_block_batch(batch_f, size_f * itemsize, sublane)
    block_batch = max(1, min(block_batch, batch_f))
    grid = (pl.cdiv(batch_f, block_batch),)

    data_spec = pl.BlockSpec((block_batch, size_f), lambda i: (i, 0))
    # Parameter tiles are constant in the batch-tile index -> they stay
    # resident in VMEM across grid steps (no per-step re-DMA).
    param_spec = pl.BlockSpec((1, size_f), lambda i: (0, 0))

    # Explicit scoped-VMEM budget: 3 streams x 2 buffers x tile + params +
    # headroom, clamped to stay inside v5e's default-overridable scoped budget
    # and well below v7x's 64 MiB physical VMEM per TensorCore.
    block_bytes = block_batch * size_f * itemsize
    param_bytes = 3 * size_f * jnp.dtype(cdt).itemsize
    footprint = 3 * 2 * block_bytes + 2 * param_bytes + (2 << 20)
    vmem_limit = int(min(max(footprint, 16 << 20), 48 << 20))

    cost = pl.CostEstimate(
        flops=4 * batch * size,
        transcendentals=0,
        bytes_accessed=3 * batch * size * itemsize + param_bytes,
    )

    out = pl.pallas_call(
        _nonspiking_kernel,
        out_shape=jax.ShapeDtypeStruct((batch_f, size_f), out_dtype),
        grid=grid,
        in_specs=[data_spec, data_spec, param_spec, param_spec, param_spec],
        out_specs=data_spec,
        # `state` (operand 1) aliases the output: in-place state update when the
        # caller donates its buffer (XLA copies otherwise, still correct).
        input_output_aliases={1: 0},
        cost_estimate=cost,
        compiler_params=pltpu.CompilerParams(
            dimension_semantics=("parallel",),   # megacore batch sharding (v7x)
            vmem_limit_bytes=vmem_limit,
        ),
    )(x_f, s_f, a_f, t_f, b_f)

    if k > 1:
        out = out.reshape(batch, size)
    return out


def _reference(x, state, tau, leak, rest, bias):
    return state + tau * (-leak * (state - rest) + bias + x)


if __name__ == "__main__":
    key = jax.random.PRNGKey(0)

    def make_case(case_key, batch, size, dtype=jnp.float32):
        k_tau, k_leak, k_bias, k_init, k_x = jax.random.split(case_key, 5)
        tau = 0.5 * jax.random.uniform(k_tau, (size,), dtype=dtype)
        leak = jax.random.uniform(k_leak, (size,), dtype=dtype)
        rest = jnp.zeros((size,), dtype=dtype)
        bias = jax.random.uniform(k_bias, (size,), dtype=dtype)
        init = jax.random.uniform(k_init, (size,), dtype=dtype)
        x = jax.random.uniform(k_x, (batch, size), dtype=dtype)
        state = jnp.tile(init, (batch, 1))  # typical usage: state starts at 'init'
        return x, state, tau, leak, rest, bias

    # (batch, size, explicit block_batch)
    cases = [
        (2, 32, None),     # tiny; lane-fold impossible (batch % 4 != 0) -> fallback path
        (16, 256, None),   # lane-dense already; multi-step grid
        (64, 32, None),    # lane-density fold: (64,32) -> (16,128)
        (32, 128, 8),      # explicit tile: grid=(4,)
    ]
    keys = jax.random.split(key, len(cases))

    ok = True
    for case_key, (batch, size, bb) in zip(keys, cases):
        x, state, tau, leak, rest, bias = make_case(case_key, batch, size)
        # Compute the reference before the kernel (the kernel aliases `state`).
        ref = _reference(x, state, tau, leak, rest, bias)
        out = nonspiking_forward(x, state, tau, leak, rest, bias, block_batch=bb)
        out = jax.block_until_ready(out)
        if not jnp.allclose(out, ref, atol=1e-5, rtol=1e-5):
            ok = False
            print(f"MISMATCH batch={batch} size={size}")

    if ok:
        print("KERNEL_OK")
</pallas_src>

<mosaic_0001>
module attributes {stable_mosaic.version = 11 : i64} {
  func.func @_nonspiking_kernel(%arg0: i32, %arg1: memref<2x32xf32, #tpu.memory_space<vmem>>, %arg2: memref<2x32xf32, #tpu.memory_space<vmem>>, %arg3: memref<1x32xf32, #tpu.memory_space<vmem>>, %arg4: memref<1x32xf32, #tpu.memory_space<vmem>>, %arg5: memref<1x32xf32, #tpu.memory_space<vmem>>, %arg6: memref<2x32xf32, #tpu.memory_space<vmem>>) attributes {dimension_semantics = [#tpu.dimension_semantics<parallel>], iteration_bounds = array<i64: 1>, scalar_prefetch = 0 : i64, scratch_operands = 0 : i64, tpu.core_type = #tpu.core_type<tc>, window_params = [{transform_indices = @transform_0, window_bounds = array<i64: 2, 32>}, {transform_indices = @transform_1, window_bounds = array<i64: 2, 32>}, {pipeline_mode = #tpu.pipeline_mode<synchronous>, transform_indices = @transform_2, window_bounds = array<i64: 1, 32>}, {pipeline_mode = #tpu.pipeline_mode<synchronous>, transform_indices = @transform_3, window_bounds = array<i64: 1, 32>}, {pipeline_mode = #tpu.pipeline_mode<synchronous>, transform_indices = @transform_4, window_bounds = array<i64: 1, 32>}, {transform_indices = @transform_5, window_bounds = array<i64: 2, 32>}]} {
    %c0 = arith.constant 0 : index
    %c0_0 = arith.constant 0 : index
    %0 = vector.load %arg1[%c0, %c0_0] : memref<2x32xf32, #tpu.memory_space<vmem>>, vector<2x32xf32>
    %c0_1 = arith.constant 0 : index
    %c0_2 = arith.constant 0 : index
    %1 = vector.load %arg2[%c0_1, %c0_2] : memref<2x32xf32, #tpu.memory_space<vmem>>, vector<2x32xf32>
    %c0_3 = arith.constant 0 : index
    %c0_4 = arith.constant 0 : index
    %2 = vector.load %arg3[%c0_3, %c0_4] : memref<1x32xf32, #tpu.memory_space<vmem>>, vector<1x32xf32>
    %3 = vector.broadcast %2 : vector<1x32xf32> to vector<2x32xf32>
    %4 = arith.mulf %1, %3 : vector<2x32xf32>
    %c0_5 = arith.constant 0 : index
    %c0_6 = arith.constant 0 : index
    %5 = vector.load %arg4[%c0_5, %c0_6] : memref<1x32xf32, #tpu.memory_space<vmem>>, vector<1x32xf32>
    %6 = vector.broadcast %5 : vector<1x32xf32> to vector<2x32xf32>
    %7 = arith.mulf %6, %0 : vector<2x32xf32>
    %8 = arith.addf %4, %7 : vector<2x32xf32>
    %c0_7 = arith.constant 0 : index
    %c0_8 = arith.constant 0 : index
    %9 = vector.load %arg5[%c0_7, %c0_8] : memref<1x32xf32, #tpu.memory_space<vmem>>, vector<1x32xf32>
    %10 = vector.broadcast %9 : vector<1x32xf32> to vector<2x32xf32>
    %11 = arith.addf %8, %10 : vector<2x32xf32>
    %c0_9 = arith.constant 0 : index
    %c0_10 = arith.constant 0 : index
    %12 = vector.load %arg6[%c0_9, %c0_10] : memref<2x32xf32, #tpu.memory_space<vmem>>, vector<2x32xf32>
    tpu.vector_store %arg6[%c0_9, %c0_10], %11 {strides = array<i32>} : memref<2x32xf32, #tpu.memory_space<vmem>>, vector<2x32xf32>,
    return
  }
  func.func @transform_0(%arg0: i32) -> (i32, i32) {
    %c0_i32 = arith.constant 0 : i32
    %c0_i32_0 = arith.constant 0 : i32
    return %arg0, %c0_i32 : i32, i32
  }
  func.func @transform_1(%arg0: i32) -> (i32, i32) {
    %c0_i32 = arith.constant 0 : i32
    %c0_i32_0 = arith.constant 0 : i32
    return %arg0, %c0_i32 : i32, i32
  }
  func.func @transform_2(%arg0: i32) -> (i32, i32) {
    %c0_i32 = arith.constant 0 : i32
    %c0_i32_0 = arith.constant 0 : i32
    %c0_i32_1 = arith.constant 0 : i32
    return %c0_i32, %c0_i32_0 : i32, i32
  }
  func.func @transform_3(%arg0: i32) -> (i32, i32) {
    %c0_i32 = arith.constant 0 : i32
    %c0_i32_0 = arith.constant 0 : i32
    %c0_i32_1 = arith.constant 0 : i32
    return %c0_i32, %c0_i32_0 : i32, i32
  }
  func.func @transform_4(%arg0: i32) -> (i32, i32) {
    %c0_i32 = arith.constant 0 : i32
    %c0_i32_0 = arith.constant 0 : i32
    %c0_i32_1 = arith.constant 0 : i32
    return %c0_i32, %c0_i32_0 : i32, i32
  }
  func.func @transform_5(%arg0: i32) -> (i32, i32) {
    %c0_i32 = arith.constant 0 : i32
    %c0_i32_0 = arith.constant 0 : i32
    return %arg0, %c0_i32 : i32, i32
  }
}

</mosaic_0001>

<llo_original>
// kernel: tpu_custom_call.1
$region0: #{tpu_custom_call.1}
  #allocation0 [shape = 'u32[]', space=smem, size = 0x4, offset = 0x4, fixed_abs, tag = 'smem constant byte address 0x4 - core index']
  #allocation1 [shape = 'u32[144,128]{1,0:T(1,128)}', space=vmem, size = 0x12000, scoped, tag = 'internal scratch']
  %s0 = inlined_call_operand.vmem [shape: f32[2,32], index: 0, kind: input, shape index: {}]
  %s1 = inlined_call_operand.hbm [shape: f32[2,32], index: 1, kind: input, shape index: {}, may-alias: {1,5}]
  %s2 = inlined_call_operand.vmem [shape: f32[1,32], index: 2, kind: input, shape index: {}]
  %s3 = inlined_call_operand.vmem [shape: f32[1,32], index: 3, kind: input, shape index: {}]
  %s4 = inlined_call_operand.hbm [shape: f32[1,32], index: 4, kind: input, shape index: {}]
  %s5 = inlined_call_operand.hbm [shape: f32[2,32], index: 5, kind: output, shape index: {}, may-alias: {1,5}]
  %s6 = sld [smem:[#allocation0]]
  $region38: #{tpu_custom_call.1} parent=0
    _
  %s8 = ssub.s32 1, %s6
  %s9 = scalar_select 0, %s8, %s6
  $region1: #{tpu_custom_call.1} parent=0
    #allocation2 [shape = 'u8[1024]{0}', space=vmem, size = 0x400, scoped, tag = 'input window, operand 1, single buffered']
    #allocation3 [shape = 's32[1]{0}', space=sflag, size = 0x4, scoped, tag = 'scoped memory for tpu_custom_call.1']
    #allocation4 [shape = 's32[1]{0}', space=sflag, size = 0x4, scoped, tag = 'scoped memory for tpu_custom_call.1']
    #allocation5 [shape = 'u8[512]{0}', space=vmem, size = 0x400, scoped, tag = 'input window, operand 4, single buffered']
    #allocation6 [shape = 's32[1]{0}', space=sflag, size = 0x4, scoped, tag = 'scoped memory for tpu_custom_call.1']
    #allocation7 [shape = 'u8[1024]{0}', space=vmem, size = 0x400, scoped, tag = 'output window, operand 0, single buffered']
    %10 = vsyncpa [#allocation3], 0
    %11 = vsyncpa [#allocation6], 0
    %12 = vsyncpa [#allocation4], 0
    // Predicated region
    $region2: #{tpu_custom_call.1} parent=1 // pred_check
      _
    $region3: #{tpu_custom_call.1} parent=1 // pred_check_branch
      %14 = sbr.rel (0) target = $region5
    $region4: #{tpu_custom_call.1} parent=1 // pred_region
      _
    $region5: #{tpu_custom_call.1} parent=1 // pred_fallthru
      _
    // Predicated region
    $region6: #{tpu_custom_call.1} parent=1 // pred_check
      _
    $region7: #{tpu_custom_call.1} parent=1 // pred_check_branch
      %16 = sbr.rel (0) target = $region9
    $region8: #{tpu_custom_call.1} parent=1 // pred_region
      %s18 = ssub.s32 32, 32
      %19 = vsyncadd [#allocation3], %s18
      %s21 = sshll.u32 [#allocation2], 4
      %s22 = int_to_ptr.vmem [resolvable:$true] %s21
      %24 = dma.hbm_to_vmem [thread:$0]  %s1, 32, %s22, [#allocation3]
    $region9: #{tpu_custom_call.1} parent=1 // pred_fallthru
      _
    // Predicated region
    $region10: #{tpu_custom_call.1} parent=1 // pred_check
      _
    $region11: #{tpu_custom_call.1} parent=1 // pred_check_branch
      %26 = sbr.rel (0) target = $region13
    $region12: #{tpu_custom_call.1} parent=1 // pred_region
      _
    $region13: #{tpu_custom_call.1} parent=1 // pred_fallthru
      _
    // Predicated region
    $region14: #{tpu_custom_call.1} parent=1 // pred_check
      _
    $region15: #{tpu_custom_call.1} parent=1 // pred_check_branch
      %28 = sbr.rel (0) target = $region17
    $region16: #{tpu_custom_call.1} parent=1 // pred_region
      _
    $region17: #{tpu_custom_call.1} parent=1 // pred_fallthru
      _
    // Predicated region
    $region18: #{tpu_custom_call.1} parent=1 // pred_check
      _
    $region19: #{tpu_custom_call.1} parent=1 // pred_check_branch
      %30 = sbr.rel (0) target = $region21
    $region20: #{tpu_custom_call.1} parent=1 // pred_region
      %s32 = ssub.s32 16, 16
      %33 = vsyncadd [#allocation6], %s32
      %s35 = sshll.u32 [#allocation5], 4
      %s36 = int_to_ptr.vmem [resolvable:$true] %s35
      %38 = dma.hbm_to_vmem [thread:$0]  %s4, 16, %s36, [#allocation6]
    $region21: #{tpu_custom_call.1} parent=1 // pred_fallthru
      _
    // Predicated region
    $region22: #{tpu_custom_call.1} parent=1 // pred_check
      _
    $region23: #{tpu_custom_call.1} parent=1 // pred_check_branch
      %40 = sbr.rel (0) target = $region25
    $region24: #{tpu_custom_call.1} parent=1 // pred_region
      %41 = dma.done [#allocation3], 32
    $region25: #{tpu_custom_call.1} parent=1 // pred_fallthru
      _
    // Predicated region
    $region26: #{tpu_custom_call.1} parent=1 // pred_check
      _
    $region27: #{tpu_custom_call.1} parent=1 // pred_check_branch
      %43 = sbr.rel (0) target = $region29
    $region28: #{tpu_custom_call.1} parent=1 // pred_region
      %44 = dma.done [#allocation6], 16
    $region29: #{tpu_custom_call.1} parent=1 // pred_fallthru
      _
    %v45 = vld [vmem:[%s0] sm:$0x3]
    %v46 = vld [vmem:[#allocation2] sm:$0x3]
    %v47 = vld [vmem:[%s2] sm:$0x1]
    %v49 = vlaneseq
    %v50 = vshrl.u32 %v49, 7
    %v51 = vsub.s32 0, %v50
    %v52 = vrot.slane %v47, %v51
    %v54 = vmul.f32 %v46, %v52
    %v55 = vld [vmem:[%s3] sm:$0x1]
    %v57 = vlaneseq
    %v58 = vshrl.u32 %v57, 7
    %v59 = vsub.s32 0, %v58
    %v60 = vrot.slane %v55, %v59
    %v62 = vmul.f32 %v60, %v45
    %v63 = vadd.f32 %v54, %v62
    %v64 = vld [vmem:[#allocation5] sm:$0x1]
    %v66 = vlaneseq
    %v67 = vshrl.u32 %v66, 7
    %v68 = vsub.s32 0, %v67
    %v69 = vrot.slane %v64, %v68
    %v71 = vadd.f32 %v63, %v69
    %vm72 = vcmask 254976
    %73 = vst.msk [vmem:[#allocation7] sm:$0x3] %vm72, %v71
    // Predicated region
    $region30: #{tpu_custom_call.1} parent=1 // pred_check
      _
    $region31: #{tpu_custom_call.1} parent=1 // pred_check_branch
      %75 = sbr.rel (0) target = $region33
    $region32: #{tpu_custom_call.1} parent=1 // pred_region
      %s77 = ssub.s32 32, 32
      %78 = vsyncadd [#allocation4], %s77
      %s80 = sshll.u32 [#allocation7], 4
      %s81 = int_to_ptr.vmem [resolvable:$true] %s80
      %83 = dma.vmem_to_hbm [thread:$0]  %s81, 32, %s5, [#allocation4]
    $region33: #{tpu_custom_call.1} parent=1 // pred_fallthru
      _
    // Predicated region
    $region34: #{tpu_custom_call.1} parent=1 // pred_check
      _
    $region35: #{tpu_custom_call.1} parent=1 // pred_check_branch
      %85 = sbr.rel (0) target = $region37
    $region36: #{tpu_custom_call.1} parent=1 // pred_region
      %86 = dma.done [#allocation4], 32
    $region37: #{tpu_custom_call.1} parent=1 // pred_fallthru
      _
    %87 = vsyncpa [#allocation3], 1
    %88 = vsyncpa [#allocation6], 1
    %89 = vsyncpa [#allocation4], 1

</llo_original>
